<compile_context>
chip_gen: v7x
topology: tpu7x:2x2x1
jax: 0.10.0
libtpu: 0.0.40
codegen_flags: <defaults>
</compile_context>

<pallas_src>
import numpy as np
import jax
import jax.numpy as jnp
from jax.experimental import pallas as pl
from jax.experimental.pallas import tpu as pltpu


def _round_up(x, m):
    return ((x + m - 1) // m) * m


# ----------------------------------------------------------------------------
# Kernel: one batch tile of the collapsed affine map  y = x @ Wc + bc
# ----------------------------------------------------------------------------
def dnn_linear_kernel(x_ref, wc_ref, bc_ref, o_ref):
    # x_ref : (BB, D)   wc_ref: (D, C)   bc_ref: (1, C)   o_ref: (BB, C)
    y = jnp.dot(x_ref[...], wc_ref[...],
                preferred_element_type=jnp.float32) + bc_ref[...]
    o_ref[...] = y.astype(o_ref.dtype)


# ----------------------------------------------------------------------------
# Wrapper
# ----------------------------------------------------------------------------
def emotion_dnn_forward(x, params, *, block_b=None):
    """Inference forward.  x: (B, input_size).  params = (fc1_w, fc1_b, fc2_w, fc2_b)
    in PyTorch layout: fc1_w (H, D), fc1_b (H,), fc2_w (C, H), fc2_b (C,)."""
    fc1_w, fc1_b, fc2_w, fc2_b = params
    B, D = x.shape
    C = fc2_w.shape[0]

    # Collapse the two linears (exact at inference: dropout = identity, no
    # nonlinearity between fc1 and fc2).  Tiny one-off matmuls done by XLA.
    # TODO(synk): training-mode dropout would forbid this collapse; implement
    # with pltpu.prng_seed + pltpu.prng_random_bits on the fc1 output if needed.
    w1t = fc1_w.T                                   # (D, H)
    w2t = fc2_w.T                                   # (H, C)
    wc = (w1t @ w2t).astype(x.dtype)                # (D, C)  ~3 KB
    bc = (fc1_b @ w2t + fc2_b).reshape(1, C).astype(jnp.float32)

    # Batch tile selection:
    #   tiny B      -> one 8-row tile (sublane minimum)
    #   otherwise   -> >= 2 grid steps (v7x dual-TC occupancy), capped at 1024
    #                  rows/tile (measured HBM-pipeline efficiency plateaus
    #                  ~512-1024; VMEM never the constraint: <1 MB/tile).
    if block_b is None:
        if B < 16:
            block_b = 8
        else:
            block_b = min(1024, _round_up(-(-B // 2), 8))
    grid = (pl.cdiv(B, block_b),)

    out = pl.pallas_call(
        dnn_linear_kernel,
        out_shape=jax.ShapeDtypeStruct((B, C), jnp.float32),
        grid=grid,
        in_specs=[
            pl.BlockSpec((block_b, D), lambda i: (i, 0)),  # x: tiled over batch
            pl.BlockSpec((D, C), lambda i: (0, 0)),        # Wc: constant block,
            pl.BlockSpec((1, C), lambda i: (0, 0)),        # bc: VMEM-resident
        ],
        out_specs=pl.BlockSpec((block_b, C), lambda i: (i, 0)),
        compiler_params=pltpu.CompilerParams(
            dimension_semantics=("parallel",)),            # shard batch on v7x's 2 TCs
    )(x, wc, bc)
    return out


# ----------------------------------------------------------------------------
# Pure-JAX reference (PyTorch semantics, dropout in eval mode = identity)
# ----------------------------------------------------------------------------
def reference_forward(x, params):
    fc1_w, fc1_b, fc2_w, fc2_b = params
    h = x @ fc1_w.T + fc1_b
    return h @ fc2_w.T + fc2_b


if __name__ == "__main__":
    key = jax.random.PRNGKey(0)
    ks = jax.random.split(key, 6)

    # Shapes consistent with the module:
    #   input_size = 3 * feature_dim (mean/max/min concat from the dataset),
    #   hidden_size = 256 (module constant), num_classes = 6.
    input_size = 3 * 40   # 120
    hidden_size = 256
    num_classes = 6

    fc1_w = jax.random.normal(ks[1], (hidden_size, input_size), jnp.float32) * 0.05
    fc1_b = jax.random.normal(ks[2], (hidden_size,), jnp.float32) * 0.1
    fc2_w = jax.random.normal(ks[3], (num_classes, hidden_size), jnp.float32) * 0.05
    fc2_b = jax.random.normal(ks[4], (num_classes,), jnp.float32) * 0.1
    params = (fc1_w, fc1_b, fc2_w, fc2_b)

    # Case 1: tiny batch (B=2) -> single partial tile.
    B1 = 2
    x1 = jax.random.normal(ks[0], (B1, input_size), jnp.float32)
    out1 = jax.block_until_ready(emotion_dnn_forward(x1, params))
    ref1 = jax.block_until_ready(reference_forward(x1, params))
    np.testing.assert_allclose(np.asarray(out1), np.asarray(ref1),
                               rtol=5e-4, atol=5e-4)
    assert out1.shape == (B1, num_classes) and out1.dtype == jnp.float32

    # Case 2: mid batch not a multiple of the tile -> 2 grid steps, masked edge
    # block, no jnp.pad / output slice anywhere.
    B2 = 100
    x2 = jax.random.normal(ks[5], (B2, input_size), jnp.float32)
    out2 = jax.block_until_ready(emotion_dnn_forward(x2, params))
    ref2 = jax.block_until_ready(reference_forward(x2, params))
    np.testing.assert_allclose(np.asarray(out2), np.asarray(ref2),
                               rtol=5e-4, atol=5e-4)
    assert out2.shape == (B2, num_classes) and out2.dtype == jnp.float32

    print("KERNEL_OK")
</pallas_src>

<mosaic_0001>
module attributes {stable_mosaic.version = 11 : i64} {
  func.func @dnn_linear_kernel(%arg0: i32, %arg1: memref<8x120xf32, #tpu.memory_space<vmem>>, %arg2: memref<120x6xf32, #tpu.memory_space<vmem>>, %arg3: memref<1x6xf32, #tpu.memory_space<vmem>>, %arg4: memref<8x6xf32, #tpu.memory_space<vmem>>) attributes {dimension_semantics = [#tpu.dimension_semantics<parallel>], iteration_bounds = array<i64: 1>, scalar_prefetch = 0 : i64, scratch_operands = 0 : i64, tpu.core_type = #tpu.core_type<tc>, window_params = [{transform_indices = @transform_0, window_bounds = array<i64: 8, 120>}, {pipeline_mode = #tpu.pipeline_mode<synchronous>, transform_indices = @transform_1, window_bounds = array<i64: 120, 6>}, {pipeline_mode = #tpu.pipeline_mode<synchronous>, transform_indices = @transform_2, window_bounds = array<i64: 1, 6>}, {transform_indices = @transform_3, window_bounds = array<i64: 8, 6>}]} {
    %c0 = arith.constant 0 : index
    %c0_0 = arith.constant 0 : index
    %0 = vector.load %arg1[%c0, %c0_0] : memref<8x120xf32, #tpu.memory_space<vmem>>, vector<8x120xf32>
    %c0_1 = arith.constant 0 : index
    %c0_2 = arith.constant 0 : index
    %1 = vector.load %arg2[%c0_1, %c0_2] : memref<120x6xf32, #tpu.memory_space<vmem>>, vector<120x6xf32>
    %cst = arith.constant dense<0.000000e+00> : vector<8x6xf32>
    %2 = tpu.matmul %0, %1, %cst {dimension_numbers = #tpu.dot_dimension_numbers<[1], [0], [0], [1], [0, 0, 1, 1], [], []>} : vector<8x120xf32>, vector<120x6xf32>, vector<8x6xf32> -> vector<8x6xf32>
    %c0_3 = arith.constant 0 : index
    %c0_4 = arith.constant 0 : index
    %3 = vector.load %arg3[%c0_3, %c0_4] : memref<1x6xf32, #tpu.memory_space<vmem>>, vector<1x6xf32>
    %4 = vector.broadcast %3 : vector<1x6xf32> to vector<8x6xf32>
    %5 = arith.addf %2, %4 : vector<8x6xf32>
    %c0_5 = arith.constant 0 : index
    %c0_6 = arith.constant 0 : index
    %6 = vector.load %arg4[%c0_5, %c0_6] : memref<8x6xf32, #tpu.memory_space<vmem>>, vector<8x6xf32>
    tpu.vector_store %arg4[%c0_5, %c0_6], %5 {strides = array<i32>} : memref<8x6xf32, #tpu.memory_space<vmem>>, vector<8x6xf32>,
    return
  }
  func.func @transform_0(%arg0: i32) -> (i32, i32) {
    %c0_i32 = arith.constant 0 : i32
    %c0_i32_0 = arith.constant 0 : i32
    return %arg0, %c0_i32 : i32, i32
  }
  func.func @transform_1(%arg0: i32) -> (i32, i32) {
    %c0_i32 = arith.constant 0 : i32
    %c0_i32_0 = arith.constant 0 : i32
    %c0_i32_1 = arith.constant 0 : i32
    return %c0_i32, %c0_i32_0 : i32, i32
  }
  func.func @transform_2(%arg0: i32) -> (i32, i32) {
    %c0_i32 = arith.constant 0 : i32
    %c0_i32_0 = arith.constant 0 : i32
    %c0_i32_1 = arith.constant 0 : i32
    return %c0_i32, %c0_i32_0 : i32, i32
  }
  func.func @transform_3(%arg0: i32) -> (i32, i32) {
    %c0_i32 = arith.constant 0 : i32
    %c0_i32_0 = arith.constant 0 : i32
    return %arg0, %c0_i32 : i32, i32
  }
}

</mosaic_0001>

<llo_original>
// kernel: tpu_custom_call.1
$region0: #{tpu_custom_call.1}
  #allocation0 [shape = 'u32[]', space=smem, size = 0x4, offset = 0x4, fixed_abs, tag = 'smem constant byte address 0x4 - core index']
  #allocation1 [shape = 'u32[144,128]{1,0:T(1,128)}', space=vmem, size = 0x12000, scoped, tag = 'internal scratch']
  %s0 = inlined_call_operand.vmem [shape: f32[2,120], index: 0, kind: input, shape index: {}]
  %s1 = inlined_call_operand.vmem [shape: f32[120,6], index: 1, kind: input, shape index: {}]
  %s2 = inlined_call_operand.vmem [shape: f32[1,6], index: 2, kind: input, shape index: {}]
  %s3 = inlined_call_operand.hbm [shape: f32[2,6], index: 3, kind: output, shape index: {}]
  %s4 = sld [smem:[#allocation0]]
  $region22: #{tpu_custom_call.1} parent=0
    _
  %s6 = ssub.s32 1, %s4
  %s7 = scalar_select 0, %s6, %s4
  $region1: #{tpu_custom_call.1} parent=0
    #allocation2 [shape = 'u8[4096]{0}', space=vmem, size = 0x1000, scoped, tag = 'output window, operand 0, single buffered']
    #allocation3 [shape = 's32[1]{0}', space=sflag, size = 0x4, scoped, tag = 'scoped memory for tpu_custom_call.1']
    %8 = vsyncpa [#allocation3], 0
    // Predicated region
    $region2: #{tpu_custom_call.1} parent=1 // pred_check
      _
    $region3: #{tpu_custom_call.1} parent=1 // pred_check_branch
      %10 = sbr.rel (0) target = $region5
    $region4: #{tpu_custom_call.1} parent=1 // pred_region
      _
    $region5: #{tpu_custom_call.1} parent=1 // pred_fallthru
      _
    // Predicated region
    $region6: #{tpu_custom_call.1} parent=1 // pred_check
      _
    $region7: #{tpu_custom_call.1} parent=1 // pred_check_branch
      %12 = sbr.rel (0) target = $region9
    $region8: #{tpu_custom_call.1} parent=1 // pred_region
      _
    $region9: #{tpu_custom_call.1} parent=1 // pred_fallthru
      _
    // Predicated region
    $region10: #{tpu_custom_call.1} parent=1 // pred_check
      _
    $region11: #{tpu_custom_call.1} parent=1 // pred_check_branch
      %14 = sbr.rel (0) target = $region13
    $region12: #{tpu_custom_call.1} parent=1 // pred_region
      _
    $region13: #{tpu_custom_call.1} parent=1 // pred_fallthru
      _
    %v15 = vld [vmem:[%s0] sm:$0xff]
    %v16 = vld [vmem:[%s1] sm:$0xff]
    %v17 = vld [vmem:[%s1 + $0x8] sm:$0xff]
    %v18 = vld [vmem:[%s1 + $0x10] sm:$0xff]
    %v19 = vld [vmem:[%s1 + $0x18] sm:$0xff]
    %v20 = vld [vmem:[%s1 + $0x20] sm:$0xff]
    %v21 = vld [vmem:[%s1 + $0x28] sm:$0xff]
    %v22 = vld [vmem:[%s1 + $0x30] sm:$0xff]
    %v23 = vld [vmem:[%s1 + $0x38] sm:$0xff]
    %v24 = vld [vmem:[%s1 + $0x40] sm:$0xff]
    %v25 = vld [vmem:[%s1 + $0x48] sm:$0xff]
    %v26 = vld [vmem:[%s1 + $0x50] sm:$0xff]
    %v27 = vld [vmem:[%s1 + $0x58] sm:$0xff]
    %v28 = vld [vmem:[%s1 + $0x60] sm:$0xff]
    %v29 = vld [vmem:[%s1 + $0x68] sm:$0xff]
    %v30 = vld [vmem:[%s1 + $0x70] sm:$0xff]
    %v31 = vld [vmem:[%s2] sm:$0x1]
    %v33 = vlaneseq
    %v34 = vshrl.u32 %v33, 7
    %v35 = vsub.s32 0, %v34
    %v36 = vrot.slane %v31, %v35
    %vm38 = vcmask 982016
    %v40 = vsel %vm38, %v15, 0
    %42 = vmatprep.subr.mxu0 0.0
    %43 = vmatpush1.msra.mxu0 %v16
    %44 = vmatprep.subr.mxu0 0.0
    %45 = vmatpush1.msra.mxu0 %v17
    %46 = vmatprep.subr.mxu0 0.0
    %47 = vmatpush1.msra.mxu0 %v18
    %48 = vmatprep.subr.mxu0 0.0
    %49 = vmatpush1.msra.mxu0 %v19
    %50 = vmatprep.subr.mxu0 0.0
    %51 = vmatpush1.msra.mxu0 %v20
    %52 = vmatprep.subr.mxu0 0.0
    %53 = vmatpush1.msra.mxu0 %v21
    %54 = vmatprep.subr.mxu0 0.0
    %55 = vmatpush1.msra.mxu0 %v22
    %56 = vmatprep.subr.mxu0 0.0
    %57 = vmatpush1.msra.mxu0 %v23
    %58 = vmatprep.subr.mxu0 0.0
    %59 = vmatpush1.msra.mxu0 %v24
    %60 = vmatprep.subr.mxu0 0.0
    %61 = vmatpush1.msra.mxu0 %v25
    %62 = vmatprep.subr.mxu0 0.0
    %63 = vmatpush1.msra.mxu0 %v26
    %64 = vmatprep.subr.mxu0 0.0
    %65 = vmatpush1.msra.mxu0 %v27
    %66 = vmatprep.subr.mxu0 0.0
    %67 = vmatpush1.msra.mxu0 %v28
    %68 = vmatprep.subr.mxu0 0.0
    %69 = vmatpush1.msra.mxu0 %v29
    %70 = vmatprep.subr.mxu0 0.0
    %71 = vmatpush1.msra.mxu0 %v30
    %72 = vmatprep.subr.mxu0 0.0
    %73 = vmatpush1.msra.mxu0 0.0
    %74 = vmatprep.subr.mxu0 0.0
    %75 = vmatpush1.msra.mxu0 0.0
    %76 = vmatprep.subr.mxu0 0.0
    %77 = vmatpush1.msra.mxu0 0.0
    %78 = vmatprep.subr.mxu0 0.0
    %79 = vmatpush1.msra.mxu0 0.0
    %80 = vmatprep.subr.mxu0 0.0
    %81 = vmatpush1.msra.mxu0 0.0
    %82 = vmatprep.subr.mxu0 0.0
    %83 = vmatpush1.msra.mxu0 0.0
    %84 = vmatprep.subr.mxu0 0.0
    %85 = vmatpush1.msra.mxu0 0.0
    %86 = vmatprep.subr.mxu0 0.0
    %87 = vmatpush1.msra.mxu0 0.0
    %88 = vmatprep.subr.mxu0 0.0
    %89 = vmatpush1.msra.mxu0 0.0
    %90 = vmatprep.subr.mxu0 0.0
    %91 = vmatpush1.msra.mxu0 0.0
    %92 = vmatprep.subr.mxu0 0.0
    %93 = vmatpush1.msra.mxu0 0.0
    %94 = vmatprep.subr.mxu0 0.0
    %95 = vmatpush1.msra.mxu0 0.0
    %96 = vmatprep.subr.mxu0 0.0
    %97 = vmatpush1.msra.mxu0 0.0
    %98 = vmatprep.subr.mxu0 0.0
    %99 = vmatpush1.msra.mxu0 0.0
    %100 = vmatprep.subr.mxu0 0.0
    %101 = vmatpush1.msra.mxu0 0.0
    %102 = vmatprep.subr.mxu0 0.0
    %103 = vmatpush1.msra.mxu0 0.0
    %104 = vmatprep.subr.mxu0 0.0
    %105 = vmatpush1.msra.mxu0 0.0
    %106 = vmatprep.mubr.f32.mxu0 0.0
    %107 = vmatmul.mubr.f32.gmra.mrb[0].mxu0 %v40
    %v108 = vpop.f32.mrb[0].mxu0
    %v109 = vadd.f32 %v36, %v108
    %v110 = vpop.f32.mrb[0].mxu0
    %111 = vdwg.mxu0
    %vm112 = vcmask 48128
    %113 = vst.msk [vmem:[#allocation2] sm:$0xff] %vm112, %v109
    // Predicated region
    $region14: #{tpu_custom_call.1} parent=1 // pred_check
      _
    $region15: #{tpu_custom_call.1} parent=1 // pred_check_branch
      %115 = sbr.rel (0) target = $region17
    $region16: #{tpu_custom_call.1} parent=1 // pred_region
      %s117 = ssub.s32 128, 32
      %118 = vsyncadd [#allocation3], %s117
      %s119 = sshll.u32 [#allocation2], 4
      %s120 = int_to_ptr.vmem [resolvable:$true] %s119
      %125 = dma.vmem_to_hbm [thread:$0]  %s120, 32, %s3, [#allocation3], 32, 32, 2
    $region17: #{tpu_custom_call.1} parent=1 // pred_fallthru
      _
    // Predicated region
    $region18: #{tpu_custom_call.1} parent=1 // pred_check
      _
    $region19: #{tpu_custom_call.1} parent=1 // pred_check_branch
      %127 = sbr.rel (0) target = $region21
    $region20: #{tpu_custom_call.1} parent=1 // pred_region
      %128 = dma.done [#allocation3], 128
    $region21: #{tpu_custom_call.1} parent=1 // pred_fallthru
      _
    %129 = vsyncpa [#allocation3], 1

</llo_original>
